<compile_context>
chip_gen: v5e
topology: v5e:2x2
jax: 0.10.0
libtpu: 0.0.40
codegen_flags: <defaults>
</compile_context>

<pallas_src>
import jax
import jax.numpy as jnp
from jax import lax
from jax.experimental import pallas as pl
from jax.experimental.pallas import tpu as pltpu


def _make_kernel(n, tn, ragged_n):
    """Kernel factory: n / tn / ragged_n are trace-time Python ints/bools."""

    def kernel(inp_t_ref, w_ref, x1_ref, x2_ref, out_ref):
        k = pl.program_id(1)  # reduction (N) axis, last in grid

        @pl.when(k == 0)
        def _():
            out_ref[...] = jnp.zeros_like(out_ref)

        # v2 tile = W @ inp^T[:, k-tile] + x1[:, k-tile]  -> (8, tn).
        # Recomputed per step: ~48*tn flops, removes any cross-step scratch
        # dependency so the P axis can be megacore-parallel.
        v2 = (
            jnp.dot(w_ref[...], inp_t_ref[...], preferred_element_type=jnp.float32)
            + x1_ref[...]
        )

        x2_blk = x2_ref[...]
        if ragged_n:
            # Last N block is partial: zero rows >= n so the accumulation
            # never ingests unspecified VMEM contents.  (inp^T / x1 are
            # zero-padded in the wrapper, so v2 columns >= n are exact zeros.)
            row = k * tn + lax.broadcasted_iota(jnp.int32, x2_blk.shape, 0)
            x2_blk = jnp.where(row < n, x2_blk, 0.0)

        out_ref[...] += jnp.dot(v2, x2_blk, preferred_element_type=jnp.float32)

    return kernel


def model_forward(x1, x2, inp, weight, *, tile_n=512, tile_p=2048):
    """x1: (6, N), x2: (N, P), inp: (N, 3), weight: (6, 3) -> (6, P)."""
    x1 = jnp.asarray(x1, jnp.float32)
    x2 = jnp.asarray(x2, jnp.float32)
    inp = jnp.asarray(inp, jnp.float32)
    weight = jnp.asarray(weight, jnp.float32)

    out_rows, in_f = weight.shape          # (6, 3)
    n, p = x2.shape                        # (N, P)

    # Sublane-dense rows: pad 6 -> 8.
    rows_pad = 8 * pl.cdiv(out_rows, 8)

    # --- N (reduction) tiling ------------------------------------------------
    if n > tile_n:
        tn = max(128, (tile_n // 128) * 128)   # lane constraint for inp^T / x1 blocks
    else:
        tn = n                                  # single full-extent block
    n_tiles = pl.cdiv(n, tn)
    n_pad = tn * n_tiles
    ragged_n = n_pad != n

    # --- P tiling -------------------------------------------------------------
    if p >= 128:
        tp = min(max(128, (tile_p // 128) * 128), (p // 128) * 128)  # lane-dense
    else:
        tp = p                                  # tiny case: full extent
    num_p = pl.cdiv(p, tp)
    p_out = tp * num_p                          # lane-dense output slab

    # --- wrapper-side layout plumbing (tiny arrays only; x2 is NOT copied) ----
    inp_t = inp.T                               # (3, N): long axis on lanes
    if ragged_n:
        inp_t = jnp.zeros((in_f, n_pad), jnp.float32).at[:, :n].set(inp_t)
    w_pad = jnp.zeros((rows_pad, in_f), jnp.float32).at[:out_rows].set(weight)
    x1_pad = jnp.zeros((rows_pad, n_pad), jnp.float32).at[:out_rows, :n].set(x1)

    grid = (num_p, n_tiles)                     # reduction axis last

    out = pl.pallas_call(
        _make_kernel(n, tn, ragged_n),
        out_shape=jax.ShapeDtypeStruct((rows_pad, p_out), jnp.float32),
        grid_spec=pltpu.PrefetchScalarGridSpec(
            num_scalar_prefetch=0,
            grid=grid,
            in_specs=[
                pl.BlockSpec((in_f, tn), lambda j, k: (0, k)),        # inp^T tile
                pl.BlockSpec((rows_pad, in_f), lambda j, k: (0, 0)),  # W (resident)
                pl.BlockSpec((rows_pad, tn), lambda j, k: (0, k)),    # x1 tile
                pl.BlockSpec((tn, tp), lambda j, k: (k, j)),          # x2 stream
            ],
            out_specs=pl.BlockSpec((rows_pad, tp), lambda j, k: (0, j)),
        ),
        compiler_params=pltpu.CompilerParams(
            dimension_semantics=("parallel", "arbitrary"),
            vmem_limit_bytes=48 * 1024 * 1024,
        ),
        cost_estimate=pl.CostEstimate(
            flops=2 * rows_pad * n * p + 2 * rows_pad * in_f * n * num_p,
            transcendentals=0,
            bytes_accessed=4 * (n * p + (in_f + rows_pad) * n_pad * num_p
                                + rows_pad * p_out),
        ),
    )(inp_t, w_pad, x1_pad, x2)

    # Strip sublane / lane padding outside the kernel.
    return out[:out_rows, :p]


if __name__ == "__main__":
    key = jax.random.PRNGKey(0)
    k_w, k_x1, k_x2, k_inp = jax.random.split(key, 4)

    # Shapes implied by the module: Linear(3, 6, bias=False); mm right operand (N, P).
    N, IN_F, OUT_F, P = 3, 3, 6, 3

    weight = jax.random.normal(k_w, (OUT_F, IN_F), dtype=jnp.float32)
    x1 = jax.random.normal(k_x1, (OUT_F, N), dtype=jnp.float32)
    x2 = jax.random.normal(k_x2, (N, P), dtype=jnp.float32)
    inp = jax.random.normal(k_inp, (N, IN_F), dtype=jnp.float32)

    out = model_forward(x1, x2, inp, weight)
    out = jax.block_until_ready(out)

    # Reference check in plain JAX.
    v1 = inp @ weight.T
    ref = (v1.T + x1) @ x2
    assert out.shape == (OUT_F, P)
    assert jnp.allclose(out, ref, atol=1e-5, rtol=1e-5)

    # Secondary check exercising the tiled path (ragged N + ragged P blocks).
    k2 = jax.random.PRNGKey(1)
    k_w2, k_x12, k_x22, k_inp2 = jax.random.split(k2, 4)
    N2, P2 = 300, 200
    weight2 = jax.random.normal(k_w2, (OUT_F, IN_F), dtype=jnp.float32)
    x1b = jax.random.normal(k_x12, (OUT_F, N2), dtype=jnp.float32)
    x2b = jax.random.normal(k_x22, (N2, P2), dtype=jnp.float32)
    inpb = jax.random.normal(k_inp2, (N2, IN_F), dtype=jnp.float32)
    outb = jax.block_until_ready(
        model_forward(x1b, x2b, inpb, weight2, tile_n=128, tile_p=128)
    )
    refb = ((inpb @ weight2.T).T + x1b) @ x2b
    assert jnp.allclose(outb, refb, atol=1e-4, rtol=1e-4)

    print("KERNEL_OK")
</pallas_src>

<mosaic_0001>
module attributes {stable_mosaic.version = 11 : i64} {
  func.func @kernel(%arg0: i32, %arg1: i32, %arg2: memref<3x3xf32, #tpu.memory_space<vmem>>, %arg3: memref<8x3xf32, #tpu.memory_space<vmem>>, %arg4: memref<8x3xf32, #tpu.memory_space<vmem>>, %arg5: memref<3x3xf32, #tpu.memory_space<vmem>>, %arg6: memref<8x3xf32, #tpu.memory_space<vmem>>) attributes {dimension_semantics = [#tpu.dimension_semantics<parallel>, #tpu.dimension_semantics<arbitrary>], iteration_bounds = array<i64: 1, 1>, scalar_prefetch = 0 : i64, scratch_operands = 0 : i64, tpu.core_type = #tpu.core_type<tc>, window_params = [{transform_indices = @transform_0, window_bounds = array<i64: 3, 3>}, {pipeline_mode = #tpu.pipeline_mode<synchronous>, transform_indices = @transform_1, window_bounds = array<i64: 8, 3>}, {transform_indices = @transform_2, window_bounds = array<i64: 8, 3>}, {transform_indices = @transform_3, window_bounds = array<i64: 3, 3>}, {transform_indices = @transform_4, window_bounds = array<i64: 8, 3>}]} {
    %c0_i32 = arith.constant 0 : i32
    %0 = arith.cmpi eq, %arg1, %c0_i32 : i32
    %1 = arith.extui %0 : i1 to i32
    %c0_i32_0 = arith.constant 0 : i32
    %2 = arith.cmpi ne, %1, %c0_i32_0 : i32
    scf.if %2 {
      %cst_13 = arith.constant 0.000000e+00 : f32
      %13 = vector.broadcast %cst_13 : f32 to vector<8x3xf32>
      %c0_14 = arith.constant 0 : index
      %c0_15 = arith.constant 0 : index
      %14 = vector.load %arg6[%c0_14, %c0_15] : memref<8x3xf32, #tpu.memory_space<vmem>>, vector<8x3xf32>
      tpu.vector_store %arg6[%c0_14, %c0_15], %13 {strides = array<i32>} : memref<8x3xf32, #tpu.memory_space<vmem>>, vector<8x3xf32>,
    } else {
    }
    %c0 = arith.constant 0 : index
    %c0_1 = arith.constant 0 : index
    %3 = vector.load %arg3[%c0, %c0_1] : memref<8x3xf32, #tpu.memory_space<vmem>>, vector<8x3xf32>
    %c0_2 = arith.constant 0 : index
    %c0_3 = arith.constant 0 : index
    %4 = vector.load %arg2[%c0_2, %c0_3] : memref<3x3xf32, #tpu.memory_space<vmem>>, vector<3x3xf32>
    %cst = arith.constant dense<0.000000e+00> : vector<8x3xf32>
    %5 = tpu.matmul %3, %4, %cst {dimension_numbers = #tpu.dot_dimension_numbers<[1], [0], [0], [1], [0, 0, 1, 1], [], []>} : vector<8x3xf32>, vector<3x3xf32>, vector<8x3xf32> -> vector<8x3xf32>
    %c0_4 = arith.constant 0 : index
    %c0_5 = arith.constant 0 : index
    %6 = vector.load %arg4[%c0_4, %c0_5] : memref<8x3xf32, #tpu.memory_space<vmem>>, vector<8x3xf32>
    %7 = arith.addf %5, %6 : vector<8x3xf32>
    %c0_6 = arith.constant 0 : index
    %c0_7 = arith.constant 0 : index
    %8 = vector.load %arg5[%c0_6, %c0_7] : memref<3x3xf32, #tpu.memory_space<vmem>>, vector<3x3xf32>
    %c0_8 = arith.constant 0 : index
    %c0_9 = arith.constant 0 : index
    %9 = vector.load %arg6[%c0_8, %c0_9] : memref<8x3xf32, #tpu.memory_space<vmem>>, vector<8x3xf32>
    %cst_10 = arith.constant dense<0.000000e+00> : vector<8x3xf32>
    %10 = tpu.matmul %7, %8, %cst_10 {dimension_numbers = #tpu.dot_dimension_numbers<[1], [0], [0], [1], [0, 0, 1, 1], [], []>} : vector<8x3xf32>, vector<3x3xf32>, vector<8x3xf32> -> vector<8x3xf32>
    %11 = arith.addf %9, %10 : vector<8x3xf32>
    %c0_11 = arith.constant 0 : index
    %c0_12 = arith.constant 0 : index
    %12 = vector.load %arg6[%c0_11, %c0_12] : memref<8x3xf32, #tpu.memory_space<vmem>>, vector<8x3xf32>
    tpu.vector_store %arg6[%c0_11, %c0_12], %11 {strides = array<i32>} : memref<8x3xf32, #tpu.memory_space<vmem>>, vector<8x3xf32>,
    return
  }
  func.func @transform_0(%arg0: i32, %arg1: i32) -> (i32, i32) {
    %c0_i32 = arith.constant 0 : i32
    %c0_i32_0 = arith.constant 0 : i32
    return %c0_i32, %arg1 : i32, i32
  }
  func.func @transform_1(%arg0: i32, %arg1: i32) -> (i32, i32) {
    %c0_i32 = arith.constant 0 : i32
    %c0_i32_0 = arith.constant 0 : i32
    %c0_i32_1 = arith.constant 0 : i32
    return %c0_i32, %c0_i32_0 : i32, i32
  }
  func.func @transform_2(%arg0: i32, %arg1: i32) -> (i32, i32) {
    %c0_i32 = arith.constant 0 : i32
    %c0_i32_0 = arith.constant 0 : i32
    return %c0_i32, %arg1 : i32, i32
  }
  func.func @transform_3(%arg0: i32, %arg1: i32) -> (i32, i32) {
    %c0_i32 = arith.constant 0 : i32
    return %arg1, %arg0 : i32, i32
  }
  func.func @transform_4(%arg0: i32, %arg1: i32) -> (i32, i32) {
    %c0_i32 = arith.constant 0 : i32
    %c0_i32_0 = arith.constant 0 : i32
    return %c0_i32, %arg0 : i32, i32
  }
}

</mosaic_0001>

<llo_original>
// kernel: tpu_custom_call.1
$region0: #{tpu_custom_call.1}
  #allocation0 [shape = 'u32[]', space=smem, size = 0x4, offset = 0x4, fixed_abs, tag = 'smem constant byte address 0x4 - core index']
  #allocation1 [shape = 'u32[72,128]{1,0:T(1,128)}', space=vmem, size = 0x9000, scoped, tag = 'internal scratch']
  %s0 = inlined_call_operand.vmem [shape: f32[3,3], index: 0, kind: input, shape index: {}]
  %s1 = inlined_call_operand.vmem [shape: f32[8,3], index: 1, kind: input, shape index: {}]
  %s2 = inlined_call_operand.vmem [shape: f32[8,3], index: 2, kind: input, shape index: {}]
  %s3 = inlined_call_operand.vmem [shape: f32[3,3], index: 3, kind: input, shape index: {}]
  %s4 = inlined_call_operand.vmem [shape: f32[8,3], index: 4, kind: output, shape index: {}]
  %s5 = sld [smem:[#allocation0]]
  $region30: #{tpu_custom_call.1} parent=0
    _
  %s7 = ssub.s32 1, %s5
  %s8 = scalar_select 0, %s7, %s5
  // Predicated region
  $region2: #{tpu_custom_call.1} parent=0 // pred_check
    _
  $region3: #{tpu_custom_call.1} parent=0 // pred_check_branch
    %10 = sbr.rel (0) target = $region5
  $region4: #{tpu_custom_call.1} parent=0 // pred_region
    _
  $region5: #{tpu_custom_call.1} parent=0 // pred_fallthru
    _
  // Predicated region
  $region6: #{tpu_custom_call.1} parent=0 // pred_check
    _
  $region7: #{tpu_custom_call.1} parent=0 // pred_check_branch
    %12 = sbr.rel (0) target = $region9
  $region8: #{tpu_custom_call.1} parent=0 // pred_region
    _
  $region9: #{tpu_custom_call.1} parent=0 // pred_fallthru
    _
  // Predicated region
  $region10: #{tpu_custom_call.1} parent=0 // pred_check
    _
  $region11: #{tpu_custom_call.1} parent=0 // pred_check_branch
    %14 = sbr.rel (0) target = $region13
  $region12: #{tpu_custom_call.1} parent=0 // pred_region
    _
  $region13: #{tpu_custom_call.1} parent=0 // pred_fallthru
    _
  // Predicated region
  $region14: #{tpu_custom_call.1} parent=0 // pred_check
    _
  $region15: #{tpu_custom_call.1} parent=0 // pred_check_branch
    %16 = sbr.rel (0) target = $region17
  $region16: #{tpu_custom_call.1} parent=0 // pred_region
    _
  $region17: #{tpu_custom_call.1} parent=0 // pred_fallthru
    _
  %p17 = scmp.eq.s32.totalorder 0, 0
  // Predicated region
  $region18: #{tpu_custom_call.1} parent=0 // pred_check
    %p18 = pneg %p17
  $region19: #{tpu_custom_call.1} parent=0 // pred_check_branch
    %20 = sbr.rel (%p18) target = $region21
  $region20: #{tpu_custom_call.1} parent=0 // pred_region
    %vm21 = vcmask 23552
    %22 = vst.msk [vmem:[%s4] sm:$0xff] %vm21, 0.0
  $region21: #{tpu_custom_call.1} parent=0 // pred_fallthru
    _
  %v23 = vld [vmem:[%s1] sm:$0xff]
  %v24 = vld [vmem:[%s0] sm:$0x7]
  %v25 = vld [vmem:[%s2] sm:$0xff]
  %vm26 = vcmask 23552
  %v28 = vsel %vm26, %v23, 0
  %vm30 = vcmask 1042432
  %v32 = vsel %vm30, %v24, 0
  %34 = vmatpush.msra.mxu0 0.0
  %35 = vmatpush.msra.mxu0 0.0
  %36 = vmatpush.msra.mxu0 0.0
  %37 = vmatpush.msra.mxu0 0.0
  %38 = vmatpush.msra.mxu0 0.0
  %39 = vmatpush.msra.mxu0 0.0
  %40 = vmatpush.msra.mxu0 0.0
  %41 = vmatpush.msra.mxu0 0.0
  %42 = vmatpush.msra.mxu0 0.0
  %43 = vmatpush.msra.mxu0 0.0
  %44 = vmatpush.msra.mxu0 0.0
  %45 = vmatpush.msra.mxu0 0.0
  %46 = vmatpush.msra.mxu0 0.0
  %47 = vmatpush.msra.mxu0 0.0
  %48 = vmatpush.msra.mxu0 0.0
  %49 = vmatpush.msra.mxu0 %v32
  %50 = vmatmul.f32.gmra.mxu0 %v28
  %v51 = vpop.f32.mrf.mxu0
  %v52 = vadd.f32 %v25, %v51
  %53 = vdwg.mxu0
  %v54 = vld [vmem:[%s3] sm:$0x7]
  %v55 = vld [vmem:[%s4] sm:$0xff]
  %v57 = vsel %vm26, %v52, 0
  %v60 = vsel %vm30, %v54, 0
  %62 = vmatpush.msra.mxu0 0.0
  %63 = vmatpush.msra.mxu0 0.0
  %64 = vmatpush.msra.mxu0 0.0
  %65 = vmatpush.msra.mxu0 0.0
  %66 = vmatpush.msra.mxu0 0.0
  %67 = vmatpush.msra.mxu0 0.0
  %68 = vmatpush.msra.mxu0 0.0
  %69 = vmatpush.msra.mxu0 0.0
  %70 = vmatpush.msra.mxu0 0.0
  %71 = vmatpush.msra.mxu0 0.0
  %72 = vmatpush.msra.mxu0 0.0
  %73 = vmatpush.msra.mxu0 0.0
  %74 = vmatpush.msra.mxu0 0.0
  %75 = vmatpush.msra.mxu0 0.0
  %76 = vmatpush.msra.mxu0 0.0
  %77 = vmatpush.msra.mxu0 %v60
  %78 = vmatmul.f32.gmra.mxu0 %v57
  %v79 = vpop.f32.mrf.mxu0
  %v80 = vadd.f32 0.0, %v79
  %81 = vdwg.mxu0
  %v82 = vadd.f32 %v55, %v80
  %83 = vst.msk [vmem:[%s4] sm:$0xff] %vm26, %v82
  // Predicated region
  $region22: #{tpu_custom_call.1} parent=0 // pred_check
    _
  $region23: #{tpu_custom_call.1} parent=0 // pred_check_branch
    %85 = sbr.rel (0) target = $region25
  $region24: #{tpu_custom_call.1} parent=0 // pred_region
    _
  $region25: #{tpu_custom_call.1} parent=0 // pred_fallthru
    _
  // Predicated region
  $region26: #{tpu_custom_call.1} parent=0 // pred_check
    _
  $region27: #{tpu_custom_call.1} parent=0 // pred_check_branch
    %87 = sbr.rel (0) target = $region29
  $region28: #{tpu_custom_call.1} parent=0 // pred_region
    _
  $region29: #{tpu_custom_call.1} parent=0 // pred_fallthru
    _

</llo_original>
